<compile_context>
chip_gen: v6e
topology: v6e:2x2x1
jax: 0.10.0
libtpu: 0.0.40
codegen_flags: <defaults>
</compile_context>

<pallas_src>
import jax
import jax.numpy as jnp
from jax.experimental import pallas as pl
from jax.experimental.pallas import tpu as pltpu

INPUT_SIZE = 1
HIDDEN_SIZE = 32
NUM_LAYERS = 1          # single-layer LSTM (matches the module)
OUTPUT_SIZE = 1


def lstm_kernel(x_ref, p_ref, out_ref):
    """Whole-sequence LSTM + linear head in one kernel invocation.

    x_ref   : (B, S)      inputs, batch-first, input_size==1 squeezed
    p_ref   : (40, 4H)    packed params:
                            rows 0..H-1 : W_hh^T        (g-cols pre-scaled x2)
                            row  H      : W_ih row      (g-cols pre-scaled x2)
                            row  H+1    : b_ih + b_hh   (g-cols pre-scaled x2)
                            row  H+2    : lanes 0..H-1 = W_lin row,
                                          lane  H      = b_lin
                            rows H+3..  : zero padding to a sublane multiple
    out_ref : (B, O)      prediction from the last timestep's hidden state
    """
    B, S = x_ref.shape
    H = HIDDEN_SIZE

    x = x_ref[...]                       # (B, S)
    p = p_ref[...]                       # (40, 4H)

    whh = p[0:H, :]                      # (H, 4H)   W_hh^T (g-cols scaled)
    wih = p[H:H + 1, :]                  # (1, 4H)
    bias = p[H + 1:H + 2, :]             # (1, 4H)
    wlin = p[H + 2:H + 3, 0:H]           # (1, H)
    blin = p[H + 2:H + 3, H:H + 1]       # (1, 1)

    # Input projection for every timestep, hoisted off the recurrence.
    # input_size == 1 -> pure VPU broadcast multiply; no dependence on h/c.
    gx = [x[:, t:t + 1] * wih + bias for t in range(S)]      # S x (B, 4H)

    h = jnp.zeros((B, H), jnp.float32)
    c = jnp.zeros((B, H), jnp.float32)

    # Fully unrolled recurrence (S small & static): one h @ W_hh^T MXU matmul
    # per step, one full-width sigmoid + one tanh(c) on the EUP per step.
    for t in range(S):
        if t == 0:
            gates = gx[0]                # h0 == 0 -> skip the matmul
        else:
            gates = (jnp.dot(h, whh, preferred_element_type=jnp.float32)
                     + gx[t])
        # One full-width sigmoid over the whole (B, 4H) gate block.
        s = jax.nn.sigmoid(gates)
        # PyTorch gate order: input, forget, cell (g), output.
        i_g = s[:, 0:H]
        f_g = s[:, H:2 * H]
        # g columns were pre-scaled by 2, so sigmoid saw 2*g_pre:
        # tanh(g_pre) = 2*sigmoid(2*g_pre) - 1  (exact up to f32 rounding).
        g_g = 2.0 * s[:, 2 * H:3 * H] - 1.0
        o_g = s[:, 3 * H:4 * H]
        c = f_g * c + i_g * g_g
        h = o_g * jnp.tanh(c)

    # Linear head (output_size == 1): VPU multiply + lane reduce, keeping the
    # MXU untouched.
    out = jnp.sum(h * wlin, axis=1, keepdims=True) + blin
    out_ref[...] = out.astype(out_ref.dtype)


def pack_params(params):
    """Pack all LSTM + linear parameters into one (40, 4H) f32 slab.

    The g-gate (cell candidate) columns of W_ih, W_hh^T and the fused bias are
    pre-scaled by 2 so the kernel can use tanh(x) = 2*sigmoid(2x) - 1.
    """
    H = HIDDEN_SIZE
    whh_t = params["w_hh"].T.astype(jnp.float32)              # (H, 4H)
    wih_row = params["w_ih"].reshape(1, 4 * H).astype(jnp.float32)   # input_size==1
    bias = (params["b_ih"] + params["b_hh"]).reshape(1, 4 * H).astype(jnp.float32)

    # Scale only the g columns (2H:3H) by 2.
    g_scale = jnp.concatenate(
        [jnp.ones((1, 2 * H), jnp.float32),
         jnp.full((1, H), 2.0, jnp.float32),
         jnp.ones((1, H), jnp.float32)], axis=1)              # (1, 4H)
    whh_t = whh_t * g_scale
    wih_row = wih_row * g_scale
    bias = bias * g_scale

    # Head row: W_lin in lanes 0..H-1, b_lin at lane H.
    head = jnp.zeros((1, 4 * H), jnp.float32)
    head = head.at[0, :H].set(params["w_lin"].reshape(H).astype(jnp.float32))
    head = head.at[0, H].set(params["b_lin"].reshape(())[()].astype(jnp.float32))

    packed = jnp.concatenate([whh_t, wih_row, bias, head], axis=0)   # (H+3, 4H)
    rows = packed.shape[0]
    pad_rows = ((rows + 7) // 8) * 8 - rows
    if pad_rows:
        packed = jnp.pad(packed, ((0, pad_rows), (0, 0)))
    return packed                                              # (40, 4H)


def stock_predictor_forward(x_bsi, params):
    """x_bsi: (batch, seq, input_size=1) float32 — PyTorch batch_first layout."""
    B, S, I = x_bsi.shape
    assert I == INPUT_SIZE == 1
    O = OUTPUT_SIZE

    # Squeeze the size-1 input dim (stay batch-first; no transpose) and pad the
    # batch to a multiple of 8 so every vreg/MXU row is used.  Pad rows are
    # sliced off the output.
    x_bs = x_bsi[:, :, 0]                                      # (B, S)
    B_pad = ((B + 7) // 8) * 8
    if B_pad != B:
        x_bs = jnp.pad(x_bs, ((0, B_pad - B), (0, 0)))

    packed = pack_params(params)                               # (40, 4H)

    out = pl.pallas_call(
        lstm_kernel,
        out_shape=jax.ShapeDtypeStruct((B_pad, O), jnp.float32),
        in_specs=[
            pl.BlockSpec(memory_space=pltpu.MemorySpace.VMEM),   # x (whole seq)
            pl.BlockSpec(memory_space=pltpu.MemorySpace.VMEM),   # packed params
        ],
        out_specs=pl.BlockSpec(memory_space=pltpu.MemorySpace.VMEM),
    )(x_bs, packed)

    return out[:B]


def init_params(key):
    """Deterministic parameter init mimicking PyTorch's U(-1/sqrt(H), 1/sqrt(H))."""
    H, I, O = HIDDEN_SIZE, INPUT_SIZE, OUTPUT_SIZE
    bound = 1.0 / jnp.sqrt(jnp.float32(H))
    ks = jax.random.split(key, 6)
    u = lambda k, shape: jax.random.uniform(k, shape, jnp.float32, -bound, bound)
    return {
        "w_ih": u(ks[0], (4 * H, I)),
        "w_hh": u(ks[1], (4 * H, H)),
        "b_ih": u(ks[2], (4 * H,)),
        "b_hh": u(ks[3], (4 * H,)),
        "w_lin": u(ks[4], (O, H)),
        "b_lin": u(ks[5], (O,)),
    }


if __name__ == "__main__":
    key = jax.random.PRNGKey(0)
    k_param, k_x = jax.random.split(key)

    params = init_params(k_param)

    batch, seq = 5, 8          # module's batch_size = 5
    x = jax.random.normal(k_x, (batch, seq, INPUT_SIZE), jnp.float32)

    out = stock_predictor_forward(x, params)
    out = jax.block_until_ready(out)

    assert out.shape == (batch, OUTPUT_SIZE)
    assert out.dtype == jnp.float32
    print("KERNEL_OK")
</pallas_src>

<mosaic_0001>
module attributes {stable_mosaic.version = 11 : i64} {
  func.func @lstm_kernel(%arg0: memref<8x8xf32, #tpu.memory_space<vmem>>, %arg1: memref<40x128xf32, #tpu.memory_space<vmem>>, %arg2: memref<8x1xf32, #tpu.memory_space<vmem>>) attributes {dimension_semantics = [], scalar_prefetch = 0 : i64, scratch_operands = 0 : i64, tpu.core_type = #tpu.core_type<tc>} {
    %c0 = arith.constant 0 : index
    %c0_0 = arith.constant 0 : index
    %0 = vector.load %arg0[%c0, %c0_0] : memref<8x8xf32, #tpu.memory_space<vmem>>, vector<8x8xf32>
    %c0_1 = arith.constant 0 : index
    %c0_2 = arith.constant 0 : index
    %1 = vector.load %arg1[%c0_1, %c0_2] : memref<40x128xf32, #tpu.memory_space<vmem>>, vector<40x128xf32>
    %2 = vector.extract_strided_slice %1 {offsets = [0, 0], sizes = [32, 128], strides = [1, 1]} : vector<40x128xf32> to vector<32x128xf32>
    %3 = vector.extract_strided_slice %1 {offsets = [32, 0], sizes = [1, 128], strides = [1, 1]} : vector<40x128xf32> to vector<1x128xf32>
    %4 = vector.extract_strided_slice %1 {offsets = [33, 0], sizes = [1, 128], strides = [1, 1]} : vector<40x128xf32> to vector<1x128xf32>
    %5 = vector.extract_strided_slice %1 {offsets = [34, 0], sizes = [1, 32], strides = [1, 1]} : vector<40x128xf32> to vector<1x32xf32>
    %6 = vector.extract_strided_slice %1 {offsets = [34, 32], sizes = [1, 1], strides = [1, 1]} : vector<40x128xf32> to vector<1x1xf32>
    %7 = vector.extract_strided_slice %0 {offsets = [0, 0], sizes = [8, 1], strides = [1, 1]} : vector<8x8xf32> to vector<8x1xf32>
    %8 = vector.broadcast %7 : vector<8x1xf32> to vector<8x128xf32>
    %9 = vector.broadcast %3 : vector<1x128xf32> to vector<8x128xf32>
    %10 = arith.mulf %8, %9 : vector<8x128xf32>
    %11 = vector.broadcast %4 : vector<1x128xf32> to vector<8x128xf32>
    %12 = arith.addf %10, %11 : vector<8x128xf32>
    %13 = vector.extract_strided_slice %0 {offsets = [0, 1], sizes = [8, 1], strides = [1, 1]} : vector<8x8xf32> to vector<8x1xf32>
    %14 = vector.broadcast %13 : vector<8x1xf32> to vector<8x128xf32>
    %15 = vector.broadcast %3 : vector<1x128xf32> to vector<8x128xf32>
    %16 = arith.mulf %14, %15 : vector<8x128xf32>
    %17 = vector.broadcast %4 : vector<1x128xf32> to vector<8x128xf32>
    %18 = arith.addf %16, %17 : vector<8x128xf32>
    %19 = vector.extract_strided_slice %0 {offsets = [0, 2], sizes = [8, 1], strides = [1, 1]} : vector<8x8xf32> to vector<8x1xf32>
    %20 = vector.broadcast %19 : vector<8x1xf32> to vector<8x128xf32>
    %21 = vector.broadcast %3 : vector<1x128xf32> to vector<8x128xf32>
    %22 = arith.mulf %20, %21 : vector<8x128xf32>
    %23 = vector.broadcast %4 : vector<1x128xf32> to vector<8x128xf32>
    %24 = arith.addf %22, %23 : vector<8x128xf32>
    %25 = vector.extract_strided_slice %0 {offsets = [0, 3], sizes = [8, 1], strides = [1, 1]} : vector<8x8xf32> to vector<8x1xf32>
    %26 = vector.broadcast %25 : vector<8x1xf32> to vector<8x128xf32>
    %27 = vector.broadcast %3 : vector<1x128xf32> to vector<8x128xf32>
    %28 = arith.mulf %26, %27 : vector<8x128xf32>
    %29 = vector.broadcast %4 : vector<1x128xf32> to vector<8x128xf32>
    %30 = arith.addf %28, %29 : vector<8x128xf32>
    %31 = vector.extract_strided_slice %0 {offsets = [0, 4], sizes = [8, 1], strides = [1, 1]} : vector<8x8xf32> to vector<8x1xf32>
    %32 = vector.broadcast %31 : vector<8x1xf32> to vector<8x128xf32>
    %33 = vector.broadcast %3 : vector<1x128xf32> to vector<8x128xf32>
    %34 = arith.mulf %32, %33 : vector<8x128xf32>
    %35 = vector.broadcast %4 : vector<1x128xf32> to vector<8x128xf32>
    %36 = arith.addf %34, %35 : vector<8x128xf32>
    %37 = vector.extract_strided_slice %0 {offsets = [0, 5], sizes = [8, 1], strides = [1, 1]} : vector<8x8xf32> to vector<8x1xf32>
    %38 = vector.broadcast %37 : vector<8x1xf32> to vector<8x128xf32>
    %39 = vector.broadcast %3 : vector<1x128xf32> to vector<8x128xf32>
    %40 = arith.mulf %38, %39 : vector<8x128xf32>
    %41 = vector.broadcast %4 : vector<1x128xf32> to vector<8x128xf32>
    %42 = arith.addf %40, %41 : vector<8x128xf32>
    %43 = vector.extract_strided_slice %0 {offsets = [0, 6], sizes = [8, 1], strides = [1, 1]} : vector<8x8xf32> to vector<8x1xf32>
    %44 = vector.broadcast %43 : vector<8x1xf32> to vector<8x128xf32>
    %45 = vector.broadcast %3 : vector<1x128xf32> to vector<8x128xf32>
    %46 = arith.mulf %44, %45 : vector<8x128xf32>
    %47 = vector.broadcast %4 : vector<1x128xf32> to vector<8x128xf32>
    %48 = arith.addf %46, %47 : vector<8x128xf32>
    %49 = vector.extract_strided_slice %0 {offsets = [0, 7], sizes = [8, 1], strides = [1, 1]} : vector<8x8xf32> to vector<8x1xf32>
    %50 = vector.broadcast %49 : vector<8x1xf32> to vector<8x128xf32>
    %51 = vector.broadcast %3 : vector<1x128xf32> to vector<8x128xf32>
    %52 = arith.mulf %50, %51 : vector<8x128xf32>
    %53 = vector.broadcast %4 : vector<1x128xf32> to vector<8x128xf32>
    %54 = arith.addf %52, %53 : vector<8x128xf32>
    %cst = arith.constant 0.000000e+00 : f32
    %55 = vector.broadcast %cst : f32 to vector<8x32xf32>
    %56 = arith.negf %12 : vector<8x128xf32>
    %57 = math.exp %56 : vector<8x128xf32>
    %cst_3 = arith.constant 1.000000e+00 : f32
    %58 = vector.broadcast %cst_3 : f32 to vector<8x128xf32>
    %59 = arith.addf %58, %57 : vector<8x128xf32>
    %60 = arith.divf %58, %59 : vector<8x128xf32>
    %61 = vector.extract_strided_slice %60 {offsets = [0, 0], sizes = [8, 32], strides = [1, 1]} : vector<8x128xf32> to vector<8x32xf32>
    %62 = vector.extract_strided_slice %60 {offsets = [0, 32], sizes = [8, 32], strides = [1, 1]} : vector<8x128xf32> to vector<8x32xf32>
    %63 = vector.extract_strided_slice %60 {offsets = [0, 64], sizes = [8, 32], strides = [1, 1]} : vector<8x128xf32> to vector<8x32xf32>
    %cst_4 = arith.constant 2.000000e+00 : f32
    %64 = vector.broadcast %cst_4 : f32 to vector<8x32xf32>
    %65 = arith.mulf %64, %63 : vector<8x32xf32>
    %cst_5 = arith.constant 1.000000e+00 : f32
    %66 = vector.broadcast %cst_5 : f32 to vector<8x32xf32>
    %67 = arith.subf %65, %66 : vector<8x32xf32>
    %68 = vector.extract_strided_slice %60 {offsets = [0, 96], sizes = [8, 32], strides = [1, 1]} : vector<8x128xf32> to vector<8x32xf32>
    %69 = arith.mulf %62, %55 : vector<8x32xf32>
    %70 = arith.mulf %61, %67 : vector<8x32xf32>
    %71 = arith.addf %69, %70 : vector<8x32xf32>
    %72 = math.tanh %71 : vector<8x32xf32>
    %73 = arith.mulf %68, %72 : vector<8x32xf32>
    %cst_6 = arith.constant dense<0.000000e+00> : vector<8x128xf32>
    %74 = tpu.matmul %73, %2, %cst_6 {dimension_numbers = #tpu.dot_dimension_numbers<[1], [0], [0], [1], [0, 0, 1, 1], [], []>} : vector<8x32xf32>, vector<32x128xf32>, vector<8x128xf32> -> vector<8x128xf32>
    %75 = arith.addf %74, %18 : vector<8x128xf32>
    %76 = arith.negf %75 : vector<8x128xf32>
    %77 = math.exp %76 : vector<8x128xf32>
    %cst_7 = arith.constant 1.000000e+00 : f32
    %78 = vector.broadcast %cst_7 : f32 to vector<8x128xf32>
    %79 = arith.addf %78, %77 : vector<8x128xf32>
    %80 = arith.divf %78, %79 : vector<8x128xf32>
    %81 = vector.extract_strided_slice %80 {offsets = [0, 0], sizes = [8, 32], strides = [1, 1]} : vector<8x128xf32> to vector<8x32xf32>
    %82 = vector.extract_strided_slice %80 {offsets = [0, 32], sizes = [8, 32], strides = [1, 1]} : vector<8x128xf32> to vector<8x32xf32>
    %83 = vector.extract_strided_slice %80 {offsets = [0, 64], sizes = [8, 32], strides = [1, 1]} : vector<8x128xf32> to vector<8x32xf32>
    %cst_8 = arith.constant 2.000000e+00 : f32
    %84 = vector.broadcast %cst_8 : f32 to vector<8x32xf32>
    %85 = arith.mulf %84, %83 : vector<8x32xf32>
    %cst_9 = arith.constant 1.000000e+00 : f32
    %86 = vector.broadcast %cst_9 : f32 to vector<8x32xf32>
    %87 = arith.subf %85, %86 : vector<8x32xf32>
    %88 = vector.extract_strided_slice %80 {offsets = [0, 96], sizes = [8, 32], strides = [1, 1]} : vector<8x128xf32> to vector<8x32xf32>
    %89 = arith.mulf %82, %71 : vector<8x32xf32>
    %90 = arith.mulf %81, %87 : vector<8x32xf32>
    %91 = arith.addf %89, %90 : vector<8x32xf32>
    %92 = math.tanh %91 : vector<8x32xf32>
    %93 = arith.mulf %88, %92 : vector<8x32xf32>
    %cst_10 = arith.constant dense<0.000000e+00> : vector<8x128xf32>
    %94 = tpu.matmul %93, %2, %cst_10 {dimension_numbers = #tpu.dot_dimension_numbers<[1], [0], [0], [1], [0, 0, 1, 1], [], []>} : vector<8x32xf32>, vector<32x128xf32>, vector<8x128xf32> -> vector<8x128xf32>
    %95 = arith.addf %94, %24 : vector<8x128xf32>
    %96 = arith.negf %95 : vector<8x128xf32>
    %97 = math.exp %96 : vector<8x128xf32>
    %cst_11 = arith.constant 1.000000e+00 : f32
    %98 = vector.broadcast %cst_11 : f32 to vector<8x128xf32>
    %99 = arith.addf %98, %97 : vector<8x128xf32>
    %100 = arith.divf %98, %99 : vector<8x128xf32>
    %101 = vector.extract_strided_slice %100 {offsets = [0, 0], sizes = [8, 32], strides = [1, 1]} : vector<8x128xf32> to vector<8x32xf32>
    %102 = vector.extract_strided_slice %100 {offsets = [0, 32], sizes = [8, 32], strides = [1, 1]} : vector<8x128xf32> to vector<8x32xf32>
    %103 = vector.extract_strided_slice %100 {offsets = [0, 64], sizes = [8, 32], strides = [1, 1]} : vector<8x128xf32> to vector<8x32xf32>
    %cst_12 = arith.constant 2.000000e+00 : f32
    %104 = vector.broadcast %cst_12 : f32 to vector<8x32xf32>
    %105 = arith.mulf %104, %103 : vector<8x32xf32>
    %cst_13 = arith.constant 1.000000e+00 : f32
    %106 = vector.broadcast %cst_13 : f32 to vector<8x32xf32>
    %107 = arith.subf %105, %106 : vector<8x32xf32>
    %108 = vector.extract_strided_slice %100 {offsets = [0, 96], sizes = [8, 32], strides = [1, 1]} : vector<8x128xf32> to vector<8x32xf32>
    %109 = arith.mulf %102, %91 : vector<8x32xf32>
    %110 = arith.mulf %101, %107 : vector<8x32xf32>
    %111 = arith.addf %109, %110 : vector<8x32xf32>
    %112 = math.tanh %111 : vector<8x32xf32>
    %113 = arith.mulf %108, %112 : vector<8x32xf32>
    %cst_14 = arith.constant dense<0.000000e+00> : vector<8x128xf32>
    %114 = tpu.matmul %113, %2, %cst_14 {dimension_numbers = #tpu.dot_dimension_numbers<[1], [0], [0], [1], [0, 0, 1, 1], [], []>} : vector<8x32xf32>, vector<32x128xf32>, vector<8x128xf32> -> vector<8x128xf32>
    %115 = arith.addf %114, %30 : vector<8x128xf32>
    %116 = arith.negf %115 : vector<8x128xf32>
    %117 = math.exp %116 : vector<8x128xf32>
    %cst_15 = arith.constant 1.000000e+00 : f32
    %118 = vector.broadcast %cst_15 : f32 to vector<8x128xf32>
    %119 = arith.addf %118, %117 : vector<8x128xf32>
    %120 = arith.divf %118, %119 : vector<8x128xf32>
    %121 = vector.extract_strided_slice %120 {offsets = [0, 0], sizes = [8, 32], strides = [1, 1]} : vector<8x128xf32> to vector<8x32xf32>
    %122 = vector.extract_strided_slice %120 {offsets = [0, 32], sizes = [8, 32], strides = [1, 1]} : vector<8x128xf32> to vector<8x32xf32>
    %123 = vector.extract_strided_slice %120 {offsets = [0, 64], sizes = [8, 32], strides = [1, 1]} : vector<8x128xf32> to vector<8x32xf32>
    %cst_16 = arith.constant 2.000000e+00 : f32
    %124 = vector.broadcast %cst_16 : f32 to vector<8x32xf32>
    %125 = arith.mulf %124, %123 : vector<8x32xf32>
    %cst_17 = arith.constant 1.000000e+00 : f32
    %126 = vector.broadcast %cst_17 : f32 to vector<8x32xf32>
    %127 = arith.subf %125, %126 : vector<8x32xf32>
    %128 = vector.extract_strided_slice %120 {offsets = [0, 96], sizes = [8, 32], strides = [1, 1]} : vector<8x128xf32> to vector<8x32xf32>
    %129 = arith.mulf %122, %111 : vector<8x32xf32>
    %130 = arith.mulf %121, %127 : vector<8x32xf32>
    %131 = arith.addf %129, %130 : vector<8x32xf32>
    %132 = math.tanh %131 : vector<8x32xf32>
    %133 = arith.mulf %128, %132 : vector<8x32xf32>
    %cst_18 = arith.constant dense<0.000000e+00> : vector<8x128xf32>
    %134 = tpu.matmul %133, %2, %cst_18 {dimension_numbers = #tpu.dot_dimension_numbers<[1], [0], [0], [1], [0, 0, 1, 1], [], []>} : vector<8x32xf32>, vector<32x128xf32>, vector<8x128xf32> -> vector<8x128xf32>
    %135 = arith.addf %134, %36 : vector<8x128xf32>
    %136 = arith.negf %135 : vector<8x128xf32>
    %137 = math.exp %136 : vector<8x128xf32>
    %cst_19 = arith.constant 1.000000e+00 : f32
    %138 = vector.broadcast %cst_19 : f32 to vector<8x128xf32>
    %139 = arith.addf %138, %137 : vector<8x128xf32>
    %140 = arith.divf %138, %139 : vector<8x128xf32>
    %141 = vector.extract_strided_slice %140 {offsets = [0, 0], sizes = [8, 32], strides = [1, 1]} : vector<8x128xf32> to vector<8x32xf32>
    %142 = vector.extract_strided_slice %140 {offsets = [0, 32], sizes = [8, 32], strides = [1, 1]} : vector<8x128xf32> to vector<8x32xf32>
    %143 = vector.extract_strided_slice %140 {offsets = [0, 64], sizes = [8, 32], strides = [1, 1]} : vector<8x128xf32> to vector<8x32xf32>
    %cst_20 = arith.constant 2.000000e+00 : f32
    %144 = vector.broadcast %cst_20 : f32 to vector<8x32xf32>
    %145 = arith.mulf %144, %143 : vector<8x32xf32>
    %cst_21 = arith.constant 1.000000e+00 : f32
    %146 = vector.broadcast %cst_21 : f32 to vector<8x32xf32>
    %147 = arith.subf %145, %146 : vector<8x32xf32>
    %148 = vector.extract_strided_slice %140 {offsets = [0, 96], sizes = [8, 32], strides = [1, 1]} : vector<8x128xf32> to vector<8x32xf32>
    %149 = arith.mulf %142, %131 : vector<8x32xf32>
    %150 = arith.mulf %141, %147 : vector<8x32xf32>
    %151 = arith.addf %149, %150 : vector<8x32xf32>
    %152 = math.tanh %151 : vector<8x32xf32>
    %153 = arith.mulf %148, %152 : vector<8x32xf32>
    %cst_22 = arith.constant dense<0.000000e+00> : vector<8x128xf32>
    %154 = tpu.matmul %153, %2, %cst_22 {dimension_numbers = #tpu.dot_dimension_numbers<[1], [0], [0], [1], [0, 0, 1, 1], [], []>} : vector<8x32xf32>, vector<32x128xf32>, vector<8x128xf32> -> vector<8x128xf32>
    %155 = arith.addf %154, %42 : vector<8x128xf32>
    %156 = arith.negf %155 : vector<8x128xf32>
    %157 = math.exp %156 : vector<8x128xf32>
    %cst_23 = arith.constant 1.000000e+00 : f32
    %158 = vector.broadcast %cst_23 : f32 to vector<8x128xf32>
    %159 = arith.addf %158, %157 : vector<8x128xf32>
    %160 = arith.divf %158, %159 : vector<8x128xf32>
    %161 = vector.extract_strided_slice %160 {offsets = [0, 0], sizes = [8, 32], strides = [1, 1]} : vector<8x128xf32> to vector<8x32xf32>
    %162 = vector.extract_strided_slice %160 {offsets = [0, 32], sizes = [8, 32], strides = [1, 1]} : vector<8x128xf32> to vector<8x32xf32>
    %163 = vector.extract_strided_slice %160 {offsets = [0, 64], sizes = [8, 32], strides = [1, 1]} : vector<8x128xf32> to vector<8x32xf32>
    %cst_24 = arith.constant 2.000000e+00 : f32
    %164 = vector.broadcast %cst_24 : f32 to vector<8x32xf32>
    %165 = arith.mulf %164, %163 : vector<8x32xf32>
    %cst_25 = arith.constant 1.000000e+00 : f32
    %166 = vector.broadcast %cst_25 : f32 to vector<8x32xf32>
    %167 = arith.subf %165, %166 : vector<8x32xf32>
    %168 = vector.extract_strided_slice %160 {offsets = [0, 96], sizes = [8, 32], strides = [1, 1]} : vector<8x128xf32> to vector<8x32xf32>
    %169 = arith.mulf %162, %151 : vector<8x32xf32>
    %170 = arith.mulf %161, %167 : vector<8x32xf32>
    %171 = arith.addf %169, %170 : vector<8x32xf32>
    %172 = math.tanh %171 : vector<8x32xf32>
    %173 = arith.mulf %168, %172 : vector<8x32xf32>
    %cst_26 = arith.constant dense<0.000000e+00> : vector<8x128xf32>
    %174 = tpu.matmul %173, %2, %cst_26 {dimension_numbers = #tpu.dot_dimension_numbers<[1], [0], [0], [1], [0, 0, 1, 1], [], []>} : vector<8x32xf32>, vector<32x128xf32>, vector<8x128xf32> -> vector<8x128xf32>
    %175 = arith.addf %174, %48 : vector<8x128xf32>
    %176 = arith.negf %175 : vector<8x128xf32>
    %177 = math.exp %176 : vector<8x128xf32>
    %cst_27 = arith.constant 1.000000e+00 : f32
    %178 = vector.broadcast %cst_27 : f32 to vector<8x128xf32>
    %179 = arith.addf %178, %177 : vector<8x128xf32>
    %180 = arith.divf %178, %179 : vector<8x128xf32>
    %181 = vector.extract_strided_slice %180 {offsets = [0, 0], sizes = [8, 32], strides = [1, 1]} : vector<8x128xf32> to vector<8x32xf32>
    %182 = vector.extract_strided_slice %180 {offsets = [0, 32], sizes = [8, 32], strides = [1, 1]} : vector<8x128xf32> to vector<8x32xf32>
    %183 = vector.extract_strided_slice %180 {offsets = [0, 64], sizes = [8, 32], strides = [1, 1]} : vector<8x128xf32> to vector<8x32xf32>
    %cst_28 = arith.constant 2.000000e+00 : f32
    %184 = vector.broadcast %cst_28 : f32 to vector<8x32xf32>
    %185 = arith.mulf %184, %183 : vector<8x32xf32>
    %cst_29 = arith.constant 1.000000e+00 : f32
    %186 = vector.broadcast %cst_29 : f32 to vector<8x32xf32>
    %187 = arith.subf %185, %186 : vector<8x32xf32>
    %188 = vector.extract_strided_slice %180 {offsets = [0, 96], sizes = [8, 32], strides = [1, 1]} : vector<8x128xf32> to vector<8x32xf32>
    %189 = arith.mulf %182, %171 : vector<8x32xf32>
    %190 = arith.mulf %181, %187 : vector<8x32xf32>
    %191 = arith.addf %189, %190 : vector<8x32xf32>
    %192 = math.tanh %191 : vector<8x32xf32>
    %193 = arith.mulf %188, %192 : vector<8x32xf32>
    %cst_30 = arith.constant dense<0.000000e+00> : vector<8x128xf32>
    %194 = tpu.matmul %193, %2, %cst_30 {dimension_numbers = #tpu.dot_dimension_numbers<[1], [0], [0], [1], [0, 0, 1, 1], [], []>} : vector<8x32xf32>, vector<32x128xf32>, vector<8x128xf32> -> vector<8x128xf32>
    %195 = arith.addf %194, %54 : vector<8x128xf32>
    %196 = arith.negf %195 : vector<8x128xf32>
    %197 = math.exp %196 : vector<8x128xf32>
    %cst_31 = arith.constant 1.000000e+00 : f32
    %198 = vector.broadcast %cst_31 : f32 to vector<8x128xf32>
    %199 = arith.addf %198, %197 : vector<8x128xf32>
    %200 = arith.divf %198, %199 : vector<8x128xf32>
    %201 = vector.extract_strided_slice %200 {offsets = [0, 0], sizes = [8, 32], strides = [1, 1]} : vector<8x128xf32> to vector<8x32xf32>
    %202 = vector.extract_strided_slice %200 {offsets = [0, 32], sizes = [8, 32], strides = [1, 1]} : vector<8x128xf32> to vector<8x32xf32>
    %203 = vector.extract_strided_slice %200 {offsets = [0, 64], sizes = [8, 32], strides = [1, 1]} : vector<8x128xf32> to vector<8x32xf32>
    %cst_32 = arith.constant 2.000000e+00 : f32
    %204 = vector.broadcast %cst_32 : f32 to vector<8x32xf32>
    %205 = arith.mulf %204, %203 : vector<8x32xf32>
    %cst_33 = arith.constant 1.000000e+00 : f32
    %206 = vector.broadcast %cst_33 : f32 to vector<8x32xf32>
    %207 = arith.subf %205, %206 : vector<8x32xf32>
    %208 = vector.extract_strided_slice %200 {offsets = [0, 96], sizes = [8, 32], strides = [1, 1]} : vector<8x128xf32> to vector<8x32xf32>
    %209 = arith.mulf %202, %191 : vector<8x32xf32>
    %210 = arith.mulf %201, %207 : vector<8x32xf32>
    %211 = arith.addf %209, %210 : vector<8x32xf32>
    %212 = math.tanh %211 : vector<8x32xf32>
    %213 = arith.mulf %208, %212 : vector<8x32xf32>
    %214 = vector.broadcast %5 : vector<1x32xf32> to vector<8x32xf32>
    %215 = arith.mulf %213, %214 : vector<8x32xf32>
    %cst_34 = arith.constant dense<0.000000e+00> : vector<8xf32>
    %216 = vector.multi_reduction <add>, %215, %cst_34 [1] : vector<8x32xf32> to vector<8xf32>
    %217 = vector.shape_cast %216 : vector<8xf32> to vector<8x1xf32>
    %218 = vector.broadcast %6 : vector<1x1xf32> to vector<8x1xf32>
    %219 = arith.addf %217, %218 : vector<8x1xf32>
    %c0_35 = arith.constant 0 : index
    %c0_36 = arith.constant 0 : index
    %220 = vector.load %arg2[%c0_35, %c0_36] : memref<8x1xf32, #tpu.memory_space<vmem>>, vector<8x1xf32>
    tpu.vector_store %arg2[%c0_35, %c0_36], %219 {strides = array<i32>} : memref<8x1xf32, #tpu.memory_space<vmem>>, vector<8x1xf32>,
    return
  }
}

</mosaic_0001>

<llo_original>
// kernel: tpu_custom_call.1
$region0: #{tpu_custom_call.1}
  #allocation0 [shape = 'u32[]', space=smem, size = 0x4, offset = 0x4, fixed_abs, tag = 'smem constant byte address 0x4 - core index']
  #allocation1 [shape = 'u32[144,128]{1,0:T(1,128)}', space=vmem, size = 0x12000, scoped, tag = 'internal scratch']
  %s0 = inlined_call_operand.hbm [shape: f32[8,8], index: 0, kind: input, shape index: {}]
  %s1 = inlined_call_operand.hbm [shape: f32[40,128], index: 1, kind: input, shape index: {}]
  %s2 = inlined_call_operand.vmem [shape: f32[8,1], index: 2, kind: output, shape index: {}]
  %s3 = sld [smem:[#allocation0]]
  $region26: #{tpu_custom_call.1} parent=0
    _
  %s5 = ssub.s32 1, %s3
  %s6 = scalar_select 0, %s5, %s3
  $region1: #{tpu_custom_call.1} parent=0
    #allocation2 [shape = 'u8[4096]{0}', space=vmem, size = 0x1000, scoped, tag = 'input window, operand 0, single buffered']
    #allocation3 [shape = 's32[1]{0}', space=sflag, size = 0x4, scoped, tag = 'scoped memory for tpu_custom_call.1']
    #allocation4 [shape = 'u8[20480]{0}', space=vmem, size = 0x5000, scoped, tag = 'input window, operand 1, single buffered']
    #allocation5 [shape = 's32[1]{0}', space=sflag, size = 0x4, scoped, tag = 'scoped memory for tpu_custom_call.1']
    %7 = vsyncpa [#allocation3], 0
    %8 = vsyncpa [#allocation5], 0
    // Predicated region
    $region2: #{tpu_custom_call.1} parent=1 // pred_check
      _
    $region3: #{tpu_custom_call.1} parent=1 // pred_check_branch
      %10 = sbr.rel (0) target = $region5
    $region4: #{tpu_custom_call.1} parent=1 // pred_region
      %s12 = ssub.s32 128, 128
      %13 = vsyncadd [#allocation3], %s12
      %s15 = sshll.u32 [#allocation2], 4
      %s16 = int_to_ptr.vmem [resolvable:$true] %s15
      %18 = dma.hbm_to_vmem [thread:$0]  %s0, 128, %s16, [#allocation3]
    $region5: #{tpu_custom_call.1} parent=1 // pred_fallthru
      _
    // Predicated region
    $region6: #{tpu_custom_call.1} parent=1 // pred_check
      _
    $region7: #{tpu_custom_call.1} parent=1 // pred_check_branch
      %20 = sbr.rel (0) target = $region9
    $region8: #{tpu_custom_call.1} parent=1 // pred_region
      %s22 = ssub.s32 640, 640
      %23 = vsyncadd [#allocation5], %s22
      %s24 = sshll.u32 [#allocation4], 4
      %s25 = int_to_ptr.vmem [resolvable:$true] %s24
      %30 = dma.hbm_to_vmem [thread:$0]  %s1, 640, %s25, [#allocation5], 128, 128, 8
    $region9: #{tpu_custom_call.1} parent=1 // pred_fallthru
      _
    // Predicated region
    $region10: #{tpu_custom_call.1} parent=1 // pred_check
      _
    $region11: #{tpu_custom_call.1} parent=1 // pred_check_branch
      %32 = sbr.rel (0) target = $region13
    $region12: #{tpu_custom_call.1} parent=1 // pred_region
      %33 = dma.done [#allocation3], 128
    $region13: #{tpu_custom_call.1} parent=1 // pred_fallthru
      _
    // Predicated region
    $region14: #{tpu_custom_call.1} parent=1 // pred_check
      _
    $region15: #{tpu_custom_call.1} parent=1 // pred_check_branch
      %35 = sbr.rel (0) target = $region17
    $region16: #{tpu_custom_call.1} parent=1 // pred_region
      %36 = dma.done [#allocation5], 640
    $region17: #{tpu_custom_call.1} parent=1 // pred_fallthru
      _
    %v37 = vld [vmem:[#allocation2] sm:$0xff]
    %v38 = vld [vmem:[#allocation4] sm:$0xff]
    %v39 = vld [vmem:[#allocation4 + $0x8] sm:$0xff]
    %v40 = vld [vmem:[#allocation4 + $0x10] sm:$0xff]
    %v41 = vld [vmem:[#allocation4 + $0x18] sm:$0xff]
    %v42 = vld [vmem:[#allocation4 + $0x20] sm:$0xff]
    %44 = vset.pattern.permute.xlu0 0
    %45 = vperm.xlu0 %44, %v37
    %v46 = vpop.permute.xlu0 %45
    %v48 = vlaneseq
    %v49 = vshrl.u32 %v48, 7
    %v50 = vsub.s32 0, %v49
    %v51 = vrot.slane %v42, %v50
    %v52 = vmul.f32 %v46, %v51
    %v53 = vlaneseq
    %v54 = vshrl.u32 %v53, 7
    %v55 = vsub.s32 1, %v54
    %v56 = vrot.slane %v42, %v55
    %v57 = vadd.f32 %v52, %v56
    %58 = vset.pattern.permute.xlu0 1
    %59 = vperm.xlu0 %58, %v37
    %v60 = vpop.permute.xlu0 %59
    %v62 = vmul.f32 %v60, %v51
    %v63 = vadd.f32 %v62, %v56
    %64 = vset.pattern.permute.xlu0 2
    %65 = vperm.xlu0 %64, %v37
    %v66 = vpop.permute.xlu0 %65
    %v68 = vmul.f32 %v66, %v51
    %v69 = vadd.f32 %v68, %v56
    %70 = vset.pattern.permute.xlu0 3
    %71 = vperm.xlu0 %70, %v37
    %v72 = vpop.permute.xlu0 %71
    %v74 = vmul.f32 %v72, %v51
    %v75 = vadd.f32 %v74, %v56
    %76 = vset.pattern.permute.xlu0 4
    %77 = vperm.xlu0 %76, %v37
    %v78 = vpop.permute.xlu0 %77
    %v80 = vmul.f32 %v78, %v51
    %v81 = vadd.f32 %v80, %v56
    %82 = vset.pattern.permute.xlu0 5
    %83 = vperm.xlu0 %82, %v37
    %v84 = vpop.permute.xlu0 %83
    %v86 = vmul.f32 %v84, %v51
    %v87 = vadd.f32 %v86, %v56
    %88 = vset.pattern.permute.xlu0 6
    %89 = vperm.xlu0 %88, %v37
    %v90 = vpop.permute.xlu0 %89
    %v92 = vmul.f32 %v90, %v51
    %v93 = vadd.f32 %v92, %v56
    %94 = vset.pattern.permute.xlu0 7
    %95 = vperm.xlu0 %94, %v37
    %v96 = vpop.permute.xlu0 %95
    %v98 = vmul.f32 %v96, %v51
    %v99 = vadd.f32 %v98, %v56
    %v100 = vxor.u32 %v57, 2147483648
    %v101 = vmul.f32 %v100, 1.442695
    %v102 = vpow.pop %v101
    %v103 = vadd.f32 %v102, 1.0
    %v104 = vrcp.pop %v103
    %v105 = vmul.f32 1.0, %v104
    %v106 = vmul.f32 %v105, 2.0
    %v107 = vsub.f32 %v106, 1.0
    %v108 = vmul.f32 %v105, 0.0
    %110 = vrot.lane.b32.xlu0 %v107, 64
    %v111 = vpop.permute.xlu0 %110
    %v113 = vmul.f32 %v105, %v111
    %115 = vrot.lane.b32.xlu0 %v113, 32
    %v116 = vpop.permute.xlu0 %115
    %v118 = vadd.f32 %v108, %v116
    %v119 = vtanh.pop %v118
    %121 = vrot.lane.b32.xlu0 %v119, 64
    %v122 = vpop.permute.xlu0 %121
    %v124 = vmul.f32 %v105, %v122
    %126 = vrot.lane.b32.xlu0 %v124, 32
    %v127 = vpop.permute.xlu0 %126
    %vm128 = vcmask 261120
    %v129 = vsel %vm128, %v127, 0
    %131 = vmatprep.subr.mxu0 0.0
    %132 = vmatpush1.msra.mxu0 0.0
    %133 = vmatprep.subr.mxu0 0.0
    %134 = vmatpush1.msra.mxu0 0.0
    %135 = vmatprep.subr.mxu0 0.0
    %136 = vmatpush1.msra.mxu0 0.0
    %137 = vmatprep.subr.mxu0 0.0
    %138 = vmatpush1.msra.mxu0 0.0
    %139 = vmatprep.subr.mxu0 0.0
    %140 = vmatpush1.msra.mxu0 0.0
    %141 = vmatprep.subr.mxu0 0.0
    %142 = vmatpush1.msra.mxu0 0.0
    %143 = vmatprep.subr.mxu0 0.0
    %144 = vmatpush1.msra.mxu0 0.0
    %145 = vmatprep.subr.mxu0 0.0
    %146 = vmatpush1.msra.mxu0 0.0
    %147 = vmatprep.subr.mxu0 0.0
    %148 = vmatpush1.msra.mxu0 0.0
    %149 = vmatprep.subr.mxu0 0.0
    %150 = vmatpush1.msra.mxu0 0.0
    %151 = vmatprep.subr.mxu0 0.0
    %152 = vmatpush1.msra.mxu0 0.0
    %153 = vmatprep.subr.mxu0 0.0
    %154 = vmatpush1.msra.mxu0 0.0
    %155 = vmatprep.subr.mxu0 0.0
    %156 = vmatpush1.msra.mxu0 %v41
    %157 = vmatprep.subr.mxu0 0.0
    %158 = vmatpush1.msra.mxu0 %v40
    %159 = vmatprep.subr.mxu0 0.0
    %160 = vmatpush1.msra.mxu0 %v39
    %161 = vmatprep.subr.mxu0 0.0
    %162 = vmatpush1.msra.mxu0 %v38
    %163 = vmatprep.subr.mxu0 0.0
    %164 = vmatpush2.msra.mxu0 0.0
    %165 = vmatprep.subr.mxu0 0.0
    %166 = vmatpush2.msra.mxu0 0.0
    %167 = vmatprep.subr.mxu0 0.0
    %168 = vmatpush2.msra.mxu0 0.0
    %169 = vmatprep.subr.mxu0 0.0
    %170 = vmatpush2.msra.mxu0 0.0
    %171 = vmatprep.subr.mxu0 0.0
    %172 = vmatpush2.msra.mxu0 0.0
    %173 = vmatprep.subr.mxu0 0.0
    %174 = vmatpush2.msra.mxu0 0.0
    %175 = vmatprep.subr.mxu0 0.0
    %176 = vmatpush2.msra.mxu0 0.0
    %177 = vmatprep.subr.mxu0 0.0
    %178 = vmatpush2.msra.mxu0 0.0
    %179 = vmatprep.subr.mxu0 0.0
    %180 = vmatpush2.msra.mxu0 0.0
    %181 = vmatprep.subr.mxu0 0.0
    %182 = vmatpush2.msra.mxu0 0.0
    %183 = vmatprep.subr.mxu0 0.0
    %184 = vmatpush2.msra.mxu0 0.0
    %185 = vmatprep.subr.mxu0 0.0
    %186 = vmatpush2.msra.mxu0 0.0
    %187 = vmatprep.subr.mxu0 0.0
    %188 = vmatpush2.msra.mxu0 0.0
    %189 = vmatprep.subr.mxu0 0.0
    %190 = vmatpush2.msra.mxu0 0.0
    %191 = vmatprep.subr.mxu0 0.0
    %192 = vmatpush2.msra.mxu0 0.0
    %193 = vmatprep.subr.mxu0 0.0
    %194 = vmatpush2.msra.mxu0 0.0
    %195 = vmatprep.mubr.f32.mxu0 0.0
    %196 = vmatmul.mubr.f32.gmra.mxu0 %v129
    %v197 = vpop.f32.mrf.mxu0
    %v198 = vadd.f32 %v63, %v197
    %v199 = vpop.f32.mrf.mxu0
    %200 = vdwg.mxu0
    %v201 = vxor.u32 %v198, 2147483648
    %v202 = vmul.f32 %v201, 1.442695
    %v203 = vpow.pop %v202
    %v204 = vadd.f32 %v203, 1.0
    %v205 = vrcp.pop %v204
    %v206 = vmul.f32 1.0, %v205
    %v207 = vmul.f32 %v206, 2.0
    %v208 = vsub.f32 %v207, 1.0
    %v209 = vmul.f32 %v206, %v118
    %211 = vrot.lane.b32.xlu0 %v208, 64
    %v212 = vpop.permute.xlu0 %211
    %v214 = vmul.f32 %v206, %v212
    %216 = vrot.lane.b32.xlu0 %v214, 32
    %v217 = vpop.permute.xlu0 %216
    %v219 = vadd.f32 %v209, %v217
    %v220 = vtanh.pop %v219
    %222 = vrot.lane.b32.xlu0 %v220, 64
    %v223 = vpop.permute.xlu0 %222
    %v225 = vmul.f32 %v206, %v223
    %227 = vrot.lane.b32.xlu0 %v225, 32
    %v228 = vpop.permute.xlu0 %227
    %v229 = vsel %vm128, %v228, 0
    %231 = vmatprep.subr.mxu0 0.0
    %232 = vmatpush1.msra.mxu0 0.0
    %233 = vmatprep.subr.mxu0 0.0
    %234 = vmatpush1.msra.mxu0 0.0
    %235 = vmatprep.subr.mxu0 0.0
    %236 = vmatpush1.msra.mxu0 0.0
    %237 = vmatprep.subr.mxu0 0.0
    %238 = vmatpush1.msra.mxu0 0.0
    %239 = vmatprep.subr.mxu0 0.0
    %240 = vmatpush1.msra.mxu0 0.0
    %241 = vmatprep.subr.mxu0 0.0
    %242 = vmatpush1.msra.mxu0 0.0
    %243 = vmatprep.subr.mxu0 0.0
    %244 = vmatpush1.msra.mxu0 0.0
    %245 = vmatprep.subr.mxu0 0.0
    %246 = vmatpush1.msra.mxu0 0.0
    %247 = vmatprep.subr.mxu0 0.0
    %248 = vmatpush1.msra.mxu0 0.0
    %249 = vmatprep.subr.mxu0 0.0
    %250 = vmatpush1.msra.mxu0 0.0
    %251 = vmatprep.subr.mxu0 0.0
    %252 = vmatpush1.msra.mxu0 0.0
    %253 = vmatprep.subr.mxu0 0.0
    %254 = vmatpush1.msra.mxu0 0.0
    %255 = vmatprep.subr.mxu0 0.0
    %256 = vmatpush1.msra.mxu0 %v41
    %257 = vmatprep.subr.mxu0 0.0
    %258 = vmatpush1.msra.mxu0 %v40
    %259 = vmatprep.subr.mxu0 0.0
    %260 = vmatpush1.msra.mxu0 %v39
    %261 = vmatprep.subr.mxu0 0.0
    %262 = vmatpush1.msra.mxu0 %v38
    %263 = vmatprep.subr.mxu0 0.0
    %264 = vmatpush2.msra.mxu0 0.0
    %265 = vmatprep.subr.mxu0 0.0
    %266 = vmatpush2.msra.mxu0 0.0
    %267 = vmatprep.subr.mxu0 0.0
    %268 = vmatpush2.msra.mxu0 0.0
    %269 = vmatprep.subr.mxu0 0.0
    %270 = vmatpush2.msra.mxu0 0.0
    %271 = vmatprep.subr.mxu0 0.0
    %272 = vmatpush2.msra.mxu0 0.0
    %273 = vmatprep.subr.mxu0 0.0
    %274 = vmatpush2.msra.mxu0 0.0
    %275 = vmatprep.subr.mxu0 0.0
    %276 = vmatpush2.msra.mxu0 0.0
    %277 = vmatprep.subr.mxu0 0.0
    %278 = vmatpush2.msra.mxu0 0.0
    %279 = vmatprep.subr.mxu0 0.0
    %280 = vmatpush2.msra.mxu0 0.0
    %281 = vmatprep.subr.mxu0 0.0
    %282 = vmatpush2.msra.mxu0 0.0
    %283 = vmatprep.subr.mxu0 0.0
    %284 = vmatpush2.msra.mxu0 0.0
    %285 = vmatprep.subr.mxu0 0.0
    %286 = vmatpush2.msra.mxu0 0.0
    %287 = vmatprep.subr.mxu0 0.0
    %288 = vmatpush2.msra.mxu0 0.0
    %289 = vmatprep.subr.mxu0 0.0
    %290 = vmatpush2.msra.mxu0 0.0
    %291 = vmatprep.subr.mxu0 0.0
    %292 = vmatpush2.msra.mxu0 0.0
    %293 = vmatprep.subr.mxu0 0.0
    %294 = vmatpush2.msra.mxu0 0.0
    %295 = vmatprep.mubr.f32.mxu0 0.0
    %296 = vmatmul.mubr.f32.gmra.mxu0 %v229
    %v297 = vpop.f32.mrf.mxu0
    %v298 = vadd.f32 %v69, %v297
    %v299 = vpop.f32.mrf.mxu0
    %300 = vdwg.mxu0
    %v301 = vxor.u32 %v298, 2147483648
    %v302 = vmul.f32 %v301, 1.442695
    %v303 = vpow.pop %v302
    %v304 = vadd.f32 %v303, 1.0
    %v305 = vrcp.pop %v304
    %v306 = vmul.f32 1.0, %v305
    %v307 = vmul.f32 %v306, 2.0
    %v308 = vsub.f32 %v307, 1.0
    %v309 = vmul.f32 %v306, %v219
    %311 = vrot.lane.b32.xlu0 %v308, 64
    %v312 = vpop.permute.xlu0 %311
    %v314 = vmul.f32 %v306, %v312
    %316 = vrot.lane.b32.xlu0 %v314, 32
    %v317 = vpop.permute.xlu0 %316
    %v319 = vadd.f32 %v309, %v317
    %v320 = vtanh.pop %v319
    %322 = vrot.lane.b32.xlu0 %v320, 64
    %v323 = vpop.permute.xlu0 %322
    %v325 = vmul.f32 %v306, %v323
    %327 = vrot.lane.b32.xlu0 %v325, 32
    %v328 = vpop.permute.xlu0 %327
    %v329 = vsel %vm128, %v328, 0
    %331 = vmatprep.subr.mxu0 0.0
    %332 = vmatpush1.msra.mxu0 0.0
    %333 = vmatprep.subr.mxu0 0.0
    %334 = vmatpush1.msra.mxu0 0.0
    %335 = vmatprep.subr.mxu0 0.0
    %336 = vmatpush1.msra.mxu0 0.0
    %337 = vmatprep.subr.mxu0 0.0
    %338 = vmatpush1.msra.mxu0 0.0
    %339 = vmatprep.subr.mxu0 0.0
    %340 = vmatpush1.msra.mxu0 0.0
    %341 = vmatprep.subr.mxu0 0.0
    %342 = vmatpush1.msra.mxu0 0.0
    %343 = vmatprep.subr.mxu0 0.0
    %344 = vmatpush1.msra.mxu0 0.0
    %345 = vmatprep.subr.mxu0 0.0
    %346 = vmatpush1.msra.mxu0 0.0
    %347 = vmatprep.subr.mxu0 0.0
    %348 = vmatpush1.msra.mxu0 0.0
    %349 = vmatprep.subr.mxu0 0.0
    %350 = vmatpush1.msra.mxu0 0.0
    %351 = vmatprep.subr.mxu0 0.0
    %352 = vmatpush1.msra.mxu0 0.0
    %353 = vmatprep.subr.mxu0 0.0
    %354 = vmatpush1.msra.mxu0 0.0
    %355 = vmatprep.subr.mxu0 0.0
    %356 = vmatpush1.msra.mxu0 %v41
    %357 = vmatprep.subr.mxu0 0.0
    %358 = vmatpush1.msra.mxu0 %v40
    %359 = vmatprep.subr.mxu0 0.0
    %360 = vmatpush1.msra.mxu0 %v39
    %361 = vmatprep.subr.mxu0 0.0
    %362 = vmatpush1.msra.mxu0 %v38
    %363 = vmatprep.subr.mxu0 0.0
    %364 = vmatpush2.msra.mxu0 0.0
    %365 = vmatprep.subr.mxu0 0.0
    %366 = vmatpush2.msra.mxu0 0.0
    %367 = vmatprep.subr.mxu0 0.0
    %368 = vmatpush2.msra.mxu0 0.0
    %369 = vmatprep.subr.mxu0 0.0
    %370 = vmatpush2.msra.mxu0 0.0
    %371 = vmatprep.subr.mxu0 0.0
    %372 = vmatpush2.msra.mxu0 0.0
    %373 = vmatprep.subr.mxu0 0.0
    %374 = vmatpush2.msra.mxu0 0.0
    %375 = vmatprep.subr.mxu0 0.0
    %376 = vmatpush2.msra.mxu0 0.0
    %377 = vmatprep.subr.mxu0 0.0
    %378 = vmatpush2.msra.mxu0 0.0
    %379 = vmatprep.subr.mxu0 0.0
    %380 = vmatpush2.msra.mxu0 0.0
    %381 = vmatprep.subr.mxu0 0.0
    %382 = vmatpush2.msra.mxu0 0.0
    %383 = vmatprep.subr.mxu0 0.0
    %384 = vmatpush2.msra.mxu0 0.0
    %385 = vmatprep.subr.mxu0 0.0
    %386 = vmatpush2.msra.mxu0 0.0
    %387 = vmatprep.subr.mxu0 0.0
    %388 = vmatpush2.msra.mxu0 0.0
    %389 = vmatprep.subr.mxu0 0.0
    %390 = vmatpush2.msra.mxu0 0.0
    %391 = vmatprep.subr.mxu0 0.0
    %392 = vmatpush2.msra.mxu0 0.0
    %393 = vmatprep.subr.mxu0 0.0
    %394 = vmatpush2.msra.mxu0 0.0
    %395 = vmatprep.mubr.f32.mxu0 0.0
    %396 = vmatmul.mubr.f32.gmra.mxu0 %v329
    %v397 = vpop.f32.mrf.mxu0
    %v398 = vadd.f32 %v75, %v397
    %v399 = vpop.f32.mrf.mxu0
    %400 = vdwg.mxu0
    %v401 = vxor.u32 %v398, 2147483648
    %v402 = vmul.f32 %v401, 1.442695
    %v403 = vpow.pop %v402
    %v404 = vadd.f32 %v403, 1.0
    %v405 = vrcp.pop %v404
    %v406 = vmul.f32 1.0, %v405
    %v407 = vmul.f32 %v406, 2.0
    %v408 = vsub.f32 %v407, 1.0
    %v409 = vmul.f32 %v406, %v319
    %411 = vrot.lane.b32.xlu0 %v408, 64
    %v412 = vpop.permute.xlu0 %411
    %v414 = vmul.f32 %v406, %v412
    %416 = vrot.lane.b32.xlu0 %v414, 32
    %v417 = vpop.permute.xlu0 %416
    %v419 = vadd.f32 %v409, %v417
    %v420 = vtanh.pop %v419
    %422 = vrot.lane.b32.xlu0 %v420, 64
    %v423 = vpop.permute.xlu0 %422
    %v425 = vmul.f32 %v406, %v423
    %427 = vrot.lane.b32.xlu0 %v425, 32
    %v428 = vpop.permute.xlu0 %427
    %v429 = vsel %vm128, %v428, 0
    %431 = vmatprep.subr.mxu0 0.0
    %432 = vmatpush1.msra.mxu0 0.0
    %433 = vmatprep.subr.mxu0 0.0
    %434 = vmatpush1.msra.mxu0 0.0
    %435 = vmatprep.subr.mxu0 0.0
    %436 = vmatpush1.msra.mxu0 0.0
    %437 = vmatprep.subr.mxu0 0.0
    %438 = vmatpush1.msra.mxu0 0.0
    %439 = vmatprep.subr.mxu0 0.0
    %440 = vmatpush1.msra.mxu0 0.0
    %441 = vmatprep.subr.mxu0 0.0
    %442 = vmatpush1.msra.mxu0 0.0
    %443 = vmatprep.subr.mxu0 0.0
    %444 = vmatpush1.msra.mxu0 0.0
    %445 = vmatprep.subr.mxu0 0.0
    %446 = vmatpush1.msra.mxu0 0.0
    %447 = vmatprep.subr.mxu0 0.0
    %448 = vmatpush1.msra.mxu0 0.0
    %449 = vmatprep.subr.mxu0 0.0
    %450 = vmatpush1.msra.mxu0 0.0
    %451 = vmatprep.subr.mxu0 0.0
    %452 = vmatpush1.msra.mxu0 0.0
    %453 = vmatprep.subr.mxu0 0.0
    %454 = vmatpush1.msra.mxu0 0.0
    %455 = vmatprep.subr.mxu0 0.0
    %456 = vmatpush1.msra.mxu0 %v41
    %457 = vmatprep.subr.mxu0 0.0
    %458 = vmatpush1.msra.mxu0 %v40
    %459 = vmatprep.subr.mxu0 0.0
    %460 = vmatpush1.msra.mxu0 %v39
    %461 = vmatprep.subr.mxu0 0.0
    %462 = vmatpush1.msra.mxu0 %v38
    %463 = vmatprep.subr.mxu0 0.0
    %464 = vmatpush2.msra.mxu0 0.0
    %465 = vmatprep.subr.mxu0 0.0
    %466 = vmatpush2.msra.mxu0 0.0
    %467 = vmatprep.subr.mxu0 0.0
    %468 = vmatpush2.msra.mxu0 0.0
    %469 = vmatprep.subr.mxu0 0.0
    %470 = vmatpush2.msra.mxu0 0.0
    %471 = vmatprep.subr.mxu0 0.0
    %472 = vmatpush2.msra.mxu0 0.0
    %473 = vmatprep.subr.mxu0 0.0
    %474 = vmatpush2.msra.mxu0 0.0
    %475 = vmatprep.subr.mxu0 0.0
    %476 = vmatpush2.msra.mxu0 0.0
    %477 = vmatprep.subr.mxu0 0.0
    %478 = vmatpush2.msra.mxu0 0.0
    %479 = vmatprep.subr.mxu0 0.0
    %480 = vmatpush2.msra.mxu0 0.0
    %481 = vmatprep.subr.mxu0 0.0
    %482 = vmatpush2.msra.mxu0 0.0
    %483 = vmatprep.subr.mxu0 0.0
    %484 = vmatpush2.msra.mxu0 0.0
    %485 = vmatprep.subr.mxu0 0.0
    %486 = vmatpush2.msra.mxu0 0.0
    %487 = vmatprep.subr.mxu0 0.0
    %488 = vmatpush2.msra.mxu0 0.0
    %489 = vmatprep.subr.mxu0 0.0
    %490 = vmatpush2.msra.mxu0 0.0
    %491 = vmatprep.subr.mxu0 0.0
    %492 = vmatpush2.msra.mxu0 0.0
    %493 = vmatprep.subr.mxu0 0.0
    %494 = vmatpush2.msra.mxu0 0.0
    %495 = vmatprep.mubr.f32.mxu0 0.0
    %496 = vmatmul.mubr.f32.gmra.mxu0 %v429
    %v497 = vpop.f32.mrf.mxu0
    %v498 = vadd.f32 %v81, %v497
    %v499 = vpop.f32.mrf.mxu0
    %500 = vdwg.mxu0
    %v501 = vxor.u32 %v498, 2147483648
    %v502 = vmul.f32 %v501, 1.442695
    %v503 = vpow.pop %v502
    %v504 = vadd.f32 %v503, 1.0
    %v505 = vrcp.pop %v504
    %v506 = vmul.f32 1.0, %v505
    %v507 = vmul.f32 %v506, 2.0
    %v508 = vsub.f32 %v507, 1.0
    %v509 = vmul.f32 %v506, %v419
    %511 = vrot.lane.b32.xlu0 %v508, 64
    %v512 = vpop.permute.xlu0 %511
    %v514 = vmul.f32 %v506, %v512
    %516 = vrot.lane.b32.xlu0 %v514, 32
    %v517 = vpop.permute.xlu0 %516
    %v519 = vadd.f32 %v509, %v517
    %v520 = vtanh.pop %v519
    %522 = vrot.lane.b32.xlu0 %v520, 64
    %v523 = vpop.permute.xlu0 %522
    %v525 = vmul.f32 %v506, %v523
    %527 = vrot.lane.b32.xlu0 %v525, 32
    %v528 = vpop.permute.xlu0 %527
    %v529 = vsel %vm128, %v528, 0
    %531 = vmatprep.subr.mxu0 0.0
    %532 = vmatpush1.msra.mxu0 0.0
    %533 = vmatprep.subr.mxu0 0.0
    %534 = vmatpush1.msra.mxu0 0.0
    %535 = vmatprep.subr.mxu0 0.0
    %536 = vmatpush1.msra.mxu0 0.0
    %537 = vmatprep.subr.mxu0 0.0
    %538 = vmatpush1.msra.mxu0 0.0
    %539 = vmatprep.subr.mxu0 0.0
    %540 = vmatpush1.msra.mxu0 0.0
    %541 = vmatprep.subr.mxu0 0.0
    %542 = vmatpush1.msra.mxu0 0.0
    %543 = vmatprep.subr.mxu0 0.0
    %544 = vmatpush1.msra.mxu0 0.0
    %545 = vmatprep.subr.mxu0 0.0
    %546 = vmatpush1.msra.mxu0 0.0
    %547 = vmatprep.subr.mxu0 0.0
    %548 = vmatpush1.msra.mxu0 0.0
    %549 = vmatprep.subr.mxu0 0.0
    %550 = vmatpush1.msra.mxu0 0.0
    %551 = vmatprep.subr.mxu0 0.0
    %552 = vmatpush1.msra.mxu0 0.0
    %553 = vmatprep.subr.mxu0 0.0
    %554 = vmatpush1.msra.mxu0 0.0
    %555 = vmatprep.subr.mxu0 0.0
    %556 = vmatpush1.msra.mxu0 %v41
    %557 = vmatprep.subr.mxu0 0.0
    %558 = vmatpush1.msra.mxu0 %v40
    %559 = vmatprep.subr.mxu0 0.0
    %560 = vmatpush1.msra.mxu0 %v39
    %561 = vmatprep.subr.mxu0 0.0
    %562 = vmatpush1.msra.mxu0 %v38
    %563 = vmatprep.subr.mxu0 0.0
    %564 = vmatpush2.msra.mxu0 0.0
    %565 = vmatprep.subr.mxu0 0.0
    %566 = vmatpush2.msra.mxu0 0.0
    %567 = vmatprep.subr.mxu0 0.0
    %568 = vmatpush2.msra.mxu0 0.0
    %569 = vmatprep.subr.mxu0 0.0
    %570 = vmatpush2.msra.mxu0 0.0
    %571 = vmatprep.subr.mxu0 0.0
    %572 = vmatpush2.msra.mxu0 0.0
    %573 = vmatprep.subr.mxu0 0.0
    %574 = vmatpush2.msra.mxu0 0.0
    %575 = vmatprep.subr.mxu0 0.0
    %576 = vmatpush2.msra.mxu0 0.0
    %577 = vmatprep.subr.mxu0 0.0
    %578 = vmatpush2.msra.mxu0 0.0
    %579 = vmatprep.subr.mxu0 0.0
    %580 = vmatpush2.msra.mxu0 0.0
    %581 = vmatprep.subr.mxu0 0.0
    %582 = vmatpush2.msra.mxu0 0.0
    %583 = vmatprep.subr.mxu0 0.0
    %584 = vmatpush2.msra.mxu0 0.0
    %585 = vmatprep.subr.mxu0 0.0
    %586 = vmatpush2.msra.mxu0 0.0
    %587 = vmatprep.subr.mxu0 0.0
    %588 = vmatpush2.msra.mxu0 0.0
    %589 = vmatprep.subr.mxu0 0.0
    %590 = vmatpush2.msra.mxu0 0.0
    %591 = vmatprep.subr.mxu0 0.0
    %592 = vmatpush2.msra.mxu0 0.0
    %593 = vmatprep.subr.mxu0 0.0
    %594 = vmatpush2.msra.mxu0 0.0
    %595 = vmatprep.mubr.f32.mxu0 0.0
    %596 = vmatmul.mubr.f32.gmra.mxu0 %v529
    %v597 = vpop.f32.mrf.mxu0
    %v598 = vadd.f32 %v87, %v597
    %v599 = vpop.f32.mrf.mxu0
    %600 = vdwg.mxu0
    %v601 = vxor.u32 %v598, 2147483648
    %v602 = vmul.f32 %v601, 1.442695
    %v603 = vpow.pop %v602
    %v604 = vadd.f32 %v603, 1.0
    %v605 = vrcp.pop %v604
    %v606 = vmul.f32 1.0, %v605
    %v607 = vmul.f32 %v606, 2.0
    %v608 = vsub.f32 %v607, 1.0
    %v609 = vmul.f32 %v606, %v519
    %611 = vrot.lane.b32.xlu0 %v608, 64
    %v612 = vpop.permute.xlu0 %611
    %v614 = vmul.f32 %v606, %v612
    %616 = vrot.lane.b32.xlu0 %v614, 32
    %v617 = vpop.permute.xlu0 %616
    %v619 = vadd.f32 %v609, %v617
    %v620 = vtanh.pop %v619
    %622 = vrot.lane.b32.xlu0 %v620, 64
    %v623 = vpop.permute.xlu0 %622
    %v625 = vmul.f32 %v606, %v623
    %627 = vrot.lane.b32.xlu0 %v625, 32
    %v628 = vpop.permute.xlu0 %627
    %v629 = vsel %vm128, %v628, 0
    %631 = vmatprep.subr.mxu0 0.0
    %632 = vmatpush1.msra.mxu0 0.0
    %633 = vmatprep.subr.mxu0 0.0
    %634 = vmatpush1.msra.mxu0 0.0
    %635 = vmatprep.subr.mxu0 0.0
    %636 = vmatpush1.msra.mxu0 0.0
    %637 = vmatprep.subr.mxu0 0.0
    %638 = vmatpush1.msra.mxu0 0.0
    %639 = vmatprep.subr.mxu0 0.0
    %640 = vmatpush1.msra.mxu0 0.0
    %641 = vmatprep.subr.mxu0 0.0
    %642 = vmatpush1.msra.mxu0 0.0
    %643 = vmatprep.subr.mxu0 0.0
    %644 = vmatpush1.msra.mxu0 0.0
    %645 = vmatprep.subr.mxu0 0.0
    %646 = vmatpush1.msra.mxu0 0.0
    %647 = vmatprep.subr.mxu0 0.0
    %648 = vmatpush1.msra.mxu0 0.0
    %649 = vmatprep.subr.mxu0 0.0
    %650 = vmatpush1.msra.mxu0 0.0
    %651 = vmatprep.subr.mxu0 0.0
    %652 = vmatpush1.msra.mxu0 0.0
    %653 = vmatprep.subr.mxu0 0.0
    %654 = vmatpush1.msra.mxu0 0.0
    %655 = vmatprep.subr.mxu0 0.0
    %656 = vmatpush1.msra.mxu0 %v41
    %657 = vmatprep.subr.mxu0 0.0
    %658 = vmatpush1.msra.mxu0 %v40
    %659 = vmatprep.subr.mxu0 0.0
    %660 = vmatpush1.msra.mxu0 %v39
    %661 = vmatprep.subr.mxu0 0.0
    %662 = vmatpush1.msra.mxu0 %v38
    %663 = vmatprep.subr.mxu0 0.0
    %664 = vmatpush2.msra.mxu0 0.0
    %665 = vmatprep.subr.mxu0 0.0
    %666 = vmatpush2.msra.mxu0 0.0
    %667 = vmatprep.subr.mxu0 0.0
    %668 = vmatpush2.msra.mxu0 0.0
    %669 = vmatprep.subr.mxu0 0.0
    %670 = vmatpush2.msra.mxu0 0.0
    %671 = vmatprep.subr.mxu0 0.0
    %672 = vmatpush2.msra.mxu0 0.0
    %673 = vmatprep.subr.mxu0 0.0
    %674 = vmatpush2.msra.mxu0 0.0
    %675 = vmatprep.subr.mxu0 0.0
    %676 = vmatpush2.msra.mxu0 0.0
    %677 = vmatprep.subr.mxu0 0.0
    %678 = vmatpush2.msra.mxu0 0.0
    %679 = vmatprep.subr.mxu0 0.0
    %680 = vmatpush2.msra.mxu0 0.0
    %681 = vmatprep.subr.mxu0 0.0
    %682 = vmatpush2.msra.mxu0 0.0
    %683 = vmatprep.subr.mxu0 0.0
    %684 = vmatpush2.msra.mxu0 0.0
    %685 = vmatprep.subr.mxu0 0.0
    %686 = vmatpush2.msra.mxu0 0.0
    %687 = vmatprep.subr.mxu0 0.0
    %688 = vmatpush2.msra.mxu0 0.0
    %689 = vmatprep.subr.mxu0 0.0
    %690 = vmatpush2.msra.mxu0 0.0
    %691 = vmatprep.subr.mxu0 0.0
    %692 = vmatpush2.msra.mxu0 0.0
    %693 = vmatprep.subr.mxu0 0.0
    %694 = vmatpush2.msra.mxu0 0.0
    %695 = vmatprep.mubr.f32.mxu0 0.0
    %696 = vmatmul.mubr.f32.gmra.mxu0 %v629
    %v697 = vpop.f32.mrf.mxu0
    %v698 = vadd.f32 %v93, %v697
    %v699 = vpop.f32.mrf.mxu0
    %700 = vdwg.mxu0
    %v701 = vxor.u32 %v698, 2147483648
    %v702 = vmul.f32 %v701, 1.442695
    %v703 = vpow.pop %v702
    %v704 = vadd.f32 %v703, 1.0
    %v705 = vrcp.pop %v704
    %v706 = vmul.f32 1.0, %v705
    %v707 = vmul.f32 %v706, 2.0
    %v708 = vsub.f32 %v707, 1.0
    %v709 = vmul.f32 %v706, %v619
    %711 = vrot.lane.b32.xlu0 %v708, 64
    %v712 = vpop.permute.xlu0 %711
    %v714 = vmul.f32 %v706, %v712
    %716 = vrot.lane.b32.xlu0 %v714, 32
    %v717 = vpop.permute.xlu0 %716
    %v719 = vadd.f32 %v709, %v717
    %v720 = vtanh.pop %v719
    %722 = vrot.lane.b32.xlu0 %v720, 64
    %v723 = vpop.permute.xlu0 %722
    %v725 = vmul.f32 %v706, %v723
    %727 = vrot.lane.b32.xlu0 %v725, 32
    %v728 = vpop.permute.xlu0 %727
    %v729 = vsel %vm128, %v728, 0
    %731 = vmatprep.subr.mxu0 0.0
    %732 = vmatpush1.msra.mxu0 0.0
    %733 = vmatprep.subr.mxu0 0.0
    %734 = vmatpush1.msra.mxu0 0.0
    %735 = vmatprep.subr.mxu0 0.0
    %736 = vmatpush1.msra.mxu0 0.0
    %737 = vmatprep.subr.mxu0 0.0
    %738 = vmatpush1.msra.mxu0 0.0
    %739 = vmatprep.subr.mxu0 0.0
    %740 = vmatpush1.msra.mxu0 0.0
    %741 = vmatprep.subr.mxu0 0.0
    %742 = vmatpush1.msra.mxu0 0.0
    %743 = vmatprep.subr.mxu0 0.0
    %744 = vmatpush1.msra.mxu0 0.0
    %745 = vmatprep.subr.mxu0 0.0
    %746 = vmatpush1.msra.mxu0 0.0
    %747 = vmatprep.subr.mxu0 0.0
    %748 = vmatpush1.msra.mxu0 0.0
    %749 = vmatprep.subr.mxu0 0.0
    %750 = vmatpush1.msra.mxu0 0.0
    %751 = vmatprep.subr.mxu0 0.0
    %752 = vmatpush1.msra.mxu0 0.0
    %753 = vmatprep.subr.mxu0 0.0
    %754 = vmatpush1.msra.mxu0 0.0
    %755 = vmatprep.subr.mxu0 0.0
    %756 = vmatpush1.msra.mxu0 %v41
    %757 = vmatprep.subr.mxu0 0.0
    %758 = vmatpush1.msra.mxu0 %v40
    %759 = vmatprep.subr.mxu0 0.0
    %760 = vmatpush1.msra.mxu0 %v39
    %761 = vmatprep.subr.mxu0 0.0
    %762 = vmatpush1.msra.mxu0 %v38
    %763 = vmatprep.subr.mxu0 0.0
    %764 = vmatpush2.msra.mxu0 0.0
    %765 = vmatprep.subr.mxu0 0.0
    %766 = vmatpush2.msra.mxu0 0.0
    %767 = vmatprep.subr.mxu0 0.0
    %768 = vmatpush2.msra.mxu0 0.0
    %769 = vmatprep.subr.mxu0 0.0
    %770 = vmatpush2.msra.mxu0 0.0
    %771 = vmatprep.subr.mxu0 0.0
    %772 = vmatpush2.msra.mxu0 0.0
    %773 = vmatprep.subr.mxu0 0.0
    %774 = vmatpush2.msra.mxu0 0.0
    %775 = vmatprep.subr.mxu0 0.0
    %776 = vmatpush2.msra.mxu0 0.0
    %777 = vmatprep.subr.mxu0 0.0
    %778 = vmatpush2.msra.mxu0 0.0
    %779 = vmatprep.subr.mxu0 0.0
    %780 = vmatpush2.msra.mxu0 0.0
    %781 = vmatprep.subr.mxu0 0.0
    %782 = vmatpush2.msra.mxu0 0.0
    %783 = vmatprep.subr.mxu0 0.0
    %784 = vmatpush2.msra.mxu0 0.0
    %785 = vmatprep.subr.mxu0 0.0
    %786 = vmatpush2.msra.mxu0 0.0
    %787 = vmatprep.subr.mxu0 0.0
    %788 = vmatpush2.msra.mxu0 0.0
    %789 = vmatprep.subr.mxu0 0.0
    %790 = vmatpush2.msra.mxu0 0.0
    %791 = vmatprep.subr.mxu0 0.0
    %792 = vmatpush2.msra.mxu0 0.0
    %793 = vmatprep.subr.mxu0 0.0
    %794 = vmatpush2.msra.mxu0 0.0
    %795 = vmatprep.mubr.f32.mxu0 0.0
    %796 = vmatmul.mubr.f32.gmra.mxu0 %v729
    %v797 = vpop.f32.mrf.mxu0
    %v798 = vadd.f32 %v99, %v797
    %v799 = vpop.f32.mrf.mxu0
    %800 = vdwg.mxu0
    %v801 = vxor.u32 %v798, 2147483648
    %v802 = vmul.f32 %v801, 1.442695
    %v803 = vpow.pop %v802
    %v804 = vadd.f32 %v803, 1.0
    %v805 = vrcp.pop %v804
    %v806 = vmul.f32 1.0, %v805
    %v807 = vmul.f32 %v806, 2.0
    %v808 = vsub.f32 %v807, 1.0
    %v809 = vmul.f32 %v806, %v719
    %811 = vrot.lane.b32.xlu0 %v808, 64
    %v812 = vpop.permute.xlu0 %811
    %v814 = vmul.f32 %v806, %v812
    %816 = vrot.lane.b32.xlu0 %v814, 32
    %v817 = vpop.permute.xlu0 %816
    %v819 = vadd.f32 %v809, %v817
    %v820 = vtanh.pop %v819
    %822 = vrot.lane.b32.xlu0 %v820, 64
    %v823 = vpop.permute.xlu0 %822
    %v825 = vmul.f32 %v806, %v823
    %v826 = vlaneseq
    %v827 = vshrl.u32 %v826, 7
    %v828 = vsub.s32 2, %v827
    %v829 = vrot.slane %v42, %v828
    %831 = vrot.lane.b32.xlu0 %v829, 96
    %v832 = vpop.permute.xlu0 %831
    %v834 = vmul.f32 %v825, %v832
    %836 = vrot.lane.b32.xlu0 %v834, 32
    %v837 = vpop.permute.xlu0 %836
    %v839 = vsel %vm128, %v837, 0.0
    %840 = vadd.xlane.f32.xlu0 %v839
    %v841 = vpop.xlane.xlu0 %840
    %v842 = vadd.f32 %v841, %v829
    %844 = vrot.lane.b32.xlu0 %v842, 96
    %v845 = vpop.permute.xlu0 %844
    %vm847 = vcmask 7168
    %848 = vst.msk [vmem:[%s2] sm:$0xff] %vm847, %v845
    // Predicated region
    $region18: #{tpu_custom_call.1} parent=1 // pred_check
      _
    $region19: #{tpu_custom_call.1} parent=1 // pred_check_branch
      %850 = sbr.rel (0) target = $region21
    $region20: #{tpu_custom_call.1} parent=1 // pred_region
      _
    $region21: #{tpu_custom_call.1} parent=1 // pred_fallthru
      _
    // Predicated region
    $region22: #{tpu_custom_call.1} parent=1 // pred_check
      _
    $region23: #{tpu_custom_call.1} parent=1 // pred_check_branch
      %852 = sbr.rel (0) target = $region25
    $region24: #{tpu_custom_call.1} parent=1 // pred_region
      _
    $region25: #{tpu_custom_call.1} parent=1 // pred_fallthru
      _
    %853 = vsyncpa [#allocation3], 1
    %854 = vsyncpa [#allocation5], 1

</llo_original>
